<compile_context>
chip_gen: v6e
topology: v6e:2x2x1
jax: 0.10.0
libtpu: 0.0.40
codegen_flags: <defaults>
</compile_context>

<pallas_src>
import functools

import numpy as np
import jax
import jax.numpy as jnp
from jax import lax
from jax.experimental import pallas as pl
from jax.experimental.pallas import tpu as pltpu


# ----------------------------------------------------------------------------
# Kernels
# ----------------------------------------------------------------------------
def _gd_kernel(x_ref, wab_ref, bab_ref, gd_ref, *, c_m):
    """Phase 1: gd[b] += A[b] @ softmax_dim0(B)[b]^T, accumulated over hw tiles."""
    @pl.when(pl.program_id(0) == 0)
    def _():
        gd_ref[...] = jnp.zeros_like(gd_ref)

    wab = wab_ref[...]                      # (c_m + c_n, c)
    bab = bab_ref[...]                      # (c_m + c_n, 1)
    b = x_ref.shape[0]

    # Fused A|B projection: one small matmul per batch image.
    ab = [jnp.dot(wab, x_ref[bi], preferred_element_type=jnp.float32) + bab
          for bi in range(b)]               # each (c_m + c_n, tile)
    A = [t[:c_m, :] for t in ab]            # (c_m, tile)
    Bp = [t[c_m:, :] for t in ab]           # (c_n, tile)

    # F.softmax(..., dim defaulting to 0): softmax across the batch axis,
    # independently per (channel, position) -> safe to tile hw.
    mx = Bp[0]
    for bi in range(1, b):
        mx = jnp.maximum(mx, Bp[bi])
    ex = [jnp.exp(t - mx) for t in Bp]
    den = ex[0]
    for bi in range(1, b):
        den = den + ex[bi]
    inv = pl.reciprocal(den)                # one reciprocal per (c_n, tile) slab

    for bi in range(b):
        att = ex[bi] * inv                  # (c_n, tile)
        # gd[bi] += A[bi] @ att^T  (contraction over the hw tile)
        gd_ref[bi] += lax.dot_general(
            A[bi], att, (((1,), (1,)), ((), ())),
            preferred_element_type=jnp.float32)


def _out_kernel(x_ref, gd_ref, wv_ref, bv_ref, wr_ref, br_ref, o_ref):
    """Phase 2: out[b] = Wr @ (gd[b] @ softmax_dim0(V)[b]) + br, per hw tile."""
    wv = wv_ref[...]                        # (c_n, c)
    bv = bv_ref[...]                        # (c_n, 1)
    wr = wr_ref[...]                        # (c, c_m)
    br = br_ref[...]                        # (c, 1)
    b = x_ref.shape[0]

    V = [jnp.dot(wv, x_ref[bi], preferred_element_type=jnp.float32) + bv
         for bi in range(b)]                # each (c_n, tile)
    mx = V[0]
    for bi in range(1, b):
        mx = jnp.maximum(mx, V[bi])
    ex = [jnp.exp(t - mx) for t in V]
    den = ex[0]
    for bi in range(1, b):
        den = den + ex[bi]
    inv = pl.reciprocal(den)

    for bi in range(b):
        att_v = ex[bi] * inv                                    # (c_n, tile)
        tmpz = jnp.dot(gd_ref[bi], att_v,
                       preferred_element_type=jnp.float32)      # (c_m, tile)
        y = jnp.dot(wr, tmpz, preferred_element_type=jnp.float32) + br
        o_ref[bi] = y.astype(o_ref.dtype)                       # lane-dense store


# ----------------------------------------------------------------------------
# Wrapper
# ----------------------------------------------------------------------------
def _pick_tile_hw(hw):
    # Largest 128-aligned tile that still yields >= 2 grid steps (so the input
    # DMA pipelines); fall back to the full extent if hw isn't 128-divisible.
    # TODO(synk): for very large c/hw, re-derive the cap against the v7x 64 MiB
    # VMEM budget (vs 128 MiB on v5e/v6e) and set vmem_limit_bytes accordingly.
    for t in (2048, 1024, 512, 256, 128):
        if hw % t == 0 and hw // t >= 2:
            return t
    return hw


def double_attention(x_nchw, params):
    """x_nchw: (b, c, h, w).  params from init_params (weights as (c_out, c_in))."""
    wa, ba, wb, bb, wv, bv, wr, br = params
    b, c, h, w = x_nchw.shape
    hw = h * w
    c_m = wa.shape[0]
    c_n = wb.shape[0]

    # NCHW flattened to (b, c, hw): zero-copy reshape, hw lands on lanes.
    x3 = x_nchw.reshape(b, c, hw)

    # Fuse the A and B projections into a single matmul.
    wab = jnp.concatenate([wa, wb], axis=0)          # (c_m + c_n, c)
    bab = jnp.concatenate([ba, bb], axis=0)          # (c_m + c_n, 1)

    tile = _pick_tile_hw(hw)
    n_tiles = hw // tile

    # Phase 1: accumulate global descriptors over hw tiles.
    gd = pl.pallas_call(
        functools.partial(_gd_kernel, c_m=c_m),
        out_shape=jax.ShapeDtypeStruct((b, c_m, c_n), jnp.float32),
        grid_spec=pltpu.PrefetchScalarGridSpec(
            num_scalar_prefetch=0,
            grid=(n_tiles,),
            in_specs=[
                pl.BlockSpec((b, c, tile), lambda i: (0, 0, i)),
                pl.BlockSpec((c_m + c_n, c), lambda i: (0, 0)),
                pl.BlockSpec((c_m + c_n, 1), lambda i: (0, 0)),
            ],
            out_specs=pl.BlockSpec((b, c_m, c_n), lambda i: (0, 0, 0)),
        ),
        compiler_params=pltpu.CompilerParams(
            dimension_semantics=("arbitrary",)),     # reduction over hw tiles
    )(x3, wab, bab)

    # Phase 2: per-tile V softmax, tmpZ and reconstruction (independent tiles).
    out3 = pl.pallas_call(
        _out_kernel,
        out_shape=jax.ShapeDtypeStruct((b, c, hw), x_nchw.dtype),
        grid_spec=pltpu.PrefetchScalarGridSpec(
            num_scalar_prefetch=0,
            grid=(n_tiles,),
            in_specs=[
                pl.BlockSpec((b, c, tile), lambda i: (0, 0, i)),
                pl.BlockSpec((b, c_m, c_n), lambda i: (0, 0, 0)),
                pl.BlockSpec((c_n, c), lambda i: (0, 0)),
                pl.BlockSpec((c_n, 1), lambda i: (0, 0)),
                pl.BlockSpec((c, c_m), lambda i: (0, 0)),
                pl.BlockSpec((c, 1), lambda i: (0, 0)),
            ],
            out_specs=pl.BlockSpec((b, c, tile), lambda i: (0, 0, i)),
        ),
        compiler_params=pltpu.CompilerParams(
            dimension_semantics=("parallel",)),      # independent hw tiles
    )(x3, gd, wv, bv, wr, br)

    return out3.reshape(b, c, h, w)


# ----------------------------------------------------------------------------
# Params / reference
# ----------------------------------------------------------------------------
def init_params(key, in_channels, c_m, c_n):
    """Kaiming-normal(fan_out) 1x1-conv weights, zero biases.
    Weights stored as (c_out, c_in) so conv1x1(x) == W @ x with x (c_in, hw)."""
    k1, k2, k3, k4 = jax.random.split(key, 4)

    def kaiming(k, c_out, c_in):
        std = np.sqrt(2.0 / c_out)          # fan_out = c_out * 1 * 1
        return jax.random.normal(k, (c_out, c_in), jnp.float32) * std

    wa = kaiming(k1, c_m, in_channels)
    wb = kaiming(k2, c_n, in_channels)
    wv = kaiming(k3, c_n, in_channels)
    wr = kaiming(k4, in_channels, c_m)
    ba = jnp.zeros((c_m, 1), jnp.float32)
    bb = jnp.zeros((c_n, 1), jnp.float32)
    bv = jnp.zeros((c_n, 1), jnp.float32)
    br = jnp.zeros((in_channels, 1), jnp.float32)
    return (wa, ba, wb, bb, wv, bv, wr, br)


def reference_forward(x, params):
    """Pure-JAX NCHW reference mirroring the PyTorch module exactly."""
    wa, ba, wb, bb, wv, bv, wr, br = params
    b, c, h, w = x.shape

    def conv1x1(x, wt, bias):               # wt: (c_out, c_in)
        y = jnp.einsum('oi,bihw->bohw', wt, x)
        return y + bias.reshape(1, -1, 1, 1)

    A = conv1x1(x, wa, ba).reshape(b, wa.shape[0], -1)        # (b, cm, hw)
    B = conv1x1(x, wb, bb).reshape(b, wb.shape[0], -1)        # (b, cn, hw)
    V = conv1x1(x, wv, bv).reshape(b, wv.shape[0], -1)        # (b, cn, hw)
    att_maps = jax.nn.softmax(B, axis=0)                      # dim=0 quirk
    att_vecs = jax.nn.softmax(V, axis=0)
    gd = jnp.einsum('bmp,bnp->bmn', A, att_maps)              # bmm(A, maps^T)
    tmpZ = jnp.einsum('bmn,bnp->bmp', gd, att_vecs)           # (b, cm, hw)
    tmpZ = tmpZ.reshape(b, wa.shape[0], h, w)
    out = conv1x1(tmpZ, wr, br)                               # (b, c, h, w)
    return out


# ----------------------------------------------------------------------------
# Main
# ----------------------------------------------------------------------------
if __name__ == "__main__":
    b, in_channels, h, w = 2, 4, 16, 16
    c_m, c_n = 8, 8

    key = jax.random.PRNGKey(0)
    kx, kp = jax.random.split(key)
    x = jax.random.normal(kx, (b, in_channels, h, w), jnp.float32)
    params = init_params(kp, in_channels, c_m, c_n)

    out = double_attention(x, params)
    out = jax.block_until_ready(out)

    ref = reference_forward(x, params)
    assert out.shape == (b, in_channels, h, w)
    np.testing.assert_allclose(np.asarray(out), np.asarray(ref),
                               rtol=1e-4, atol=1e-4)
    print("KERNEL_OK")
</pallas_src>

<mosaic_0001>
module attributes {stable_mosaic.version = 11 : i64} {
  func.func @_gd_kernel(%arg0: i32, %arg1: memref<2x4x128xf32, #tpu.memory_space<vmem>>, %arg2: memref<16x4xf32, #tpu.memory_space<vmem>>, %arg3: memref<16x1xf32, #tpu.memory_space<vmem>>, %arg4: memref<2x8x8xf32, #tpu.memory_space<vmem>>) attributes {dimension_semantics = [#tpu.dimension_semantics<arbitrary>], iteration_bounds = array<i64: 2>, scalar_prefetch = 0 : i64, scratch_operands = 0 : i64, tpu.core_type = #tpu.core_type<tc>, window_params = [{transform_indices = @transform_0, window_bounds = array<i64: 2, 4, 128>}, {pipeline_mode = #tpu.pipeline_mode<synchronous>, transform_indices = @transform_1, window_bounds = array<i64: 16, 4>}, {pipeline_mode = #tpu.pipeline_mode<synchronous>, transform_indices = @transform_2, window_bounds = array<i64: 16, 1>}, {pipeline_mode = #tpu.pipeline_mode<synchronous>, transform_indices = @transform_3, window_bounds = array<i64: 2, 8, 8>}]} {
    %c0_i32 = arith.constant 0 : i32
    %0 = arith.cmpi eq, %arg0, %c0_i32 : i32
    %1 = arith.extui %0 : i1 to i32
    %c0_i32_0 = arith.constant 0 : i32
    %2 = arith.cmpi ne, %1, %c0_i32_0 : i32
    scf.if %2 {
      %cst_24 = arith.constant 0.000000e+00 : f32
      %42 = vector.broadcast %cst_24 : f32 to vector<2x8x8xf32>
      %c0_25 = arith.constant 0 : index
      %c0_26 = arith.constant 0 : index
      %c0_27 = arith.constant 0 : index
      %43 = vector.load %arg4[%c0_25, %c0_26, %c0_27] : memref<2x8x8xf32, #tpu.memory_space<vmem>>, vector<2x8x8xf32>
      tpu.vector_store %arg4[%c0_25, %c0_26, %c0_27], %42 {strides = array<i32>} : memref<2x8x8xf32, #tpu.memory_space<vmem>>, vector<2x8x8xf32>,
    } else {
    }
    %c0 = arith.constant 0 : index
    %c0_1 = arith.constant 0 : index
    %3 = vector.load %arg2[%c0, %c0_1] : memref<16x4xf32, #tpu.memory_space<vmem>>, vector<16x4xf32>
    %c0_2 = arith.constant 0 : index
    %c0_3 = arith.constant 0 : index
    %4 = vector.load %arg3[%c0_2, %c0_3] : memref<16x1xf32, #tpu.memory_space<vmem>>, vector<16x1xf32>
    %c0_4 = arith.constant 0 : index
    %c0_5 = arith.constant 0 : index
    %c0_6 = arith.constant 0 : index
    %5 = vector.load %arg1[%c0_4, %c0_5, %c0_6] : memref<2x4x128xf32, #tpu.memory_space<vmem>>, vector<1x4x128xf32>
    %6 = vector.shape_cast %5 : vector<1x4x128xf32> to vector<4x128xf32>
    %cst = arith.constant dense<0.000000e+00> : vector<16x128xf32>
    %7 = tpu.matmul %3, %6, %cst {dimension_numbers = #tpu.dot_dimension_numbers<[1], [0], [0], [1], [0, 0, 1, 1], [], []>} : vector<16x4xf32>, vector<4x128xf32>, vector<16x128xf32> -> vector<16x128xf32>
    %8 = vector.broadcast %4 : vector<16x1xf32> to vector<16x128xf32>
    %9 = arith.addf %7, %8 : vector<16x128xf32>
    %c1 = arith.constant 1 : index
    %c0_7 = arith.constant 0 : index
    %c0_8 = arith.constant 0 : index
    %10 = vector.load %arg1[%c1, %c0_7, %c0_8] : memref<2x4x128xf32, #tpu.memory_space<vmem>>, vector<1x4x128xf32>
    %11 = vector.shape_cast %10 : vector<1x4x128xf32> to vector<4x128xf32>
    %cst_9 = arith.constant dense<0.000000e+00> : vector<16x128xf32>
    %12 = tpu.matmul %3, %11, %cst_9 {dimension_numbers = #tpu.dot_dimension_numbers<[1], [0], [0], [1], [0, 0, 1, 1], [], []>} : vector<16x4xf32>, vector<4x128xf32>, vector<16x128xf32> -> vector<16x128xf32>
    %13 = vector.broadcast %4 : vector<16x1xf32> to vector<16x128xf32>
    %14 = arith.addf %12, %13 : vector<16x128xf32>
    %15 = vector.extract_strided_slice %9 {offsets = [0, 0], sizes = [8, 128], strides = [1, 1]} : vector<16x128xf32> to vector<8x128xf32>
    %16 = vector.extract_strided_slice %14 {offsets = [0, 0], sizes = [8, 128], strides = [1, 1]} : vector<16x128xf32> to vector<8x128xf32>
    %17 = vector.extract_strided_slice %9 {offsets = [8, 0], sizes = [8, 128], strides = [1, 1]} : vector<16x128xf32> to vector<8x128xf32>
    %18 = vector.extract_strided_slice %14 {offsets = [8, 0], sizes = [8, 128], strides = [1, 1]} : vector<16x128xf32> to vector<8x128xf32>
    %19 = arith.maximumf %17, %18 : vector<8x128xf32>
    %20 = arith.subf %17, %19 : vector<8x128xf32>
    %21 = math.exp %20 : vector<8x128xf32>
    %22 = arith.subf %18, %19 : vector<8x128xf32>
    %23 = math.exp %22 : vector<8x128xf32>
    %24 = arith.addf %21, %23 : vector<8x128xf32>
    %25 = tpu.reciprocal %24 : vector<8x128xf32> -> vector<8x128xf32>
    %26 = arith.mulf %21, %25 : vector<8x128xf32>
    %c0_10 = arith.constant 0 : index
    %c0_11 = arith.constant 0 : index
    %c0_12 = arith.constant 0 : index
    %27 = vector.load %arg4[%c0_10, %c0_11, %c0_12] : memref<2x8x8xf32, #tpu.memory_space<vmem>>, vector<1x8x8xf32>
    %28 = vector.shape_cast %27 : vector<1x8x8xf32> to vector<8x8xf32>
    %cst_13 = arith.constant dense<0.000000e+00> : vector<8x8xf32>
    %29 = tpu.matmul %15, %26, %cst_13 {dimension_numbers = #tpu.dot_dimension_numbers<[1], [1], [0], [0], [0, 0, 1, 0], [], []>} : vector<8x128xf32>, vector<8x128xf32>, vector<8x8xf32> -> vector<8x8xf32>
    %30 = arith.addf %28, %29 : vector<8x8xf32>
    %c0_14 = arith.constant 0 : index
    %c0_15 = arith.constant 0 : index
    %c0_16 = arith.constant 0 : index
    %31 = vector.load %arg4[%c0_14, %c0_15, %c0_16] : memref<2x8x8xf32, #tpu.memory_space<vmem>>, vector<1x8x8xf32>
    %32 = vector.shape_cast %31 : vector<1x8x8xf32> to vector<8x8xf32>
    %33 = vector.shape_cast %30 : vector<8x8xf32> to vector<1x8x8xf32>
    tpu.vector_store %arg4[%c0_14, %c0_15, %c0_16], %33 {strides = array<i32>} : memref<2x8x8xf32, #tpu.memory_space<vmem>>, vector<1x8x8xf32>,
    %34 = arith.mulf %23, %25 : vector<8x128xf32>
    %c1_17 = arith.constant 1 : index
    %c0_18 = arith.constant 0 : index
    %c0_19 = arith.constant 0 : index
    %35 = vector.load %arg4[%c1_17, %c0_18, %c0_19] : memref<2x8x8xf32, #tpu.memory_space<vmem>>, vector<1x8x8xf32>
    %36 = vector.shape_cast %35 : vector<1x8x8xf32> to vector<8x8xf32>
    %cst_20 = arith.constant dense<0.000000e+00> : vector<8x8xf32>
    %37 = tpu.matmul %16, %34, %cst_20 {dimension_numbers = #tpu.dot_dimension_numbers<[1], [1], [0], [0], [0, 0, 1, 0], [], []>} : vector<8x128xf32>, vector<8x128xf32>, vector<8x8xf32> -> vector<8x8xf32>
    %38 = arith.addf %36, %37 : vector<8x8xf32>
    %c1_21 = arith.constant 1 : index
    %c0_22 = arith.constant 0 : index
    %c0_23 = arith.constant 0 : index
    %39 = vector.load %arg4[%c1_21, %c0_22, %c0_23] : memref<2x8x8xf32, #tpu.memory_space<vmem>>, vector<1x8x8xf32>
    %40 = vector.shape_cast %39 : vector<1x8x8xf32> to vector<8x8xf32>
    %41 = vector.shape_cast %38 : vector<8x8xf32> to vector<1x8x8xf32>
    tpu.vector_store %arg4[%c1_21, %c0_22, %c0_23], %41 {strides = array<i32>} : memref<2x8x8xf32, #tpu.memory_space<vmem>>, vector<1x8x8xf32>,
    return
  }
  func.func @transform_0(%arg0: i32) -> (i32, i32, i32) {
    %c0_i32 = arith.constant 0 : i32
    %c0_i32_0 = arith.constant 0 : i32
    %c0_i32_1 = arith.constant 0 : i32
    return %c0_i32, %c0_i32_0, %arg0 : i32, i32, i32
  }
  func.func @transform_1(%arg0: i32) -> (i32, i32) {
    %c0_i32 = arith.constant 0 : i32
    %c0_i32_0 = arith.constant 0 : i32
    %c0_i32_1 = arith.constant 0 : i32
    return %c0_i32, %c0_i32_0 : i32, i32
  }
  func.func @transform_2(%arg0: i32) -> (i32, i32) {
    %c0_i32 = arith.constant 0 : i32
    %c0_i32_0 = arith.constant 0 : i32
    %c0_i32_1 = arith.constant 0 : i32
    return %c0_i32, %c0_i32_0 : i32, i32
  }
  func.func @transform_3(%arg0: i32) -> (i32, i32, i32) {
    %c0_i32 = arith.constant 0 : i32
    %c0_i32_0 = arith.constant 0 : i32
    %c0_i32_1 = arith.constant 0 : i32
    %c0_i32_2 = arith.constant 0 : i32
    return %c0_i32, %c0_i32_0, %c0_i32_1 : i32, i32, i32
  }
}

</mosaic_0001>

<llo_original>
// kernel: tpu_custom_call.1
$region0: #{tpu_custom_call.1}
  #allocation0 [shape = 'u32[]', space=smem, size = 0x4, offset = 0x4, fixed_abs, tag = 'smem constant byte address 0x4 - core index']
  #allocation1 [shape = 'u32[144,128]{1,0:T(1,128)}', space=vmem, size = 0x12000, scoped, tag = 'internal scratch']
  %s0 = inlined_call_operand.vmem [shape: f32[2,4,256], index: 0, kind: input, shape index: {}]
  %s1 = inlined_call_operand.vmem [shape: f32[16,4], index: 1, kind: input, shape index: {}]
  %s2 = inlined_call_operand.vmem [shape: f32[16,1], index: 2, kind: input, shape index: {}]
  %s3 = inlined_call_operand.hbm [shape: f32[2,8,8], index: 3, kind: output, shape index: {}]
  %s4 = sld [smem:[#allocation0]]
  $region90: #{tpu_custom_call.1} parent=0
    _
  %s6 = ssub.s32 1, %s4
  %s7 = scalar_select 0, %s6, %s4
  $region1: #{tpu_custom_call.1} parent=0
    #allocation2 [shape = 'u8[8192]{0}', space=vmem, size = 0x2000, scoped, tag = 'input window, operand 0']
    #allocation3 [shape = 'u8[8192]{0}', space=vmem, size = 0x2000, scoped, tag = 'output window, operand 0, single buffered']
    #allocation4 [shape = 's32[2]{0}', space=sflag, size = 0x8, scoped, tag = 'scoped memory for tpu_custom_call.1']
    %8 = vsyncpa [#allocation4], 0
    loop: start=0, step=1, limit=4
    $region2: #{tpu_custom_call.1} parent=1 // loop_pre_header
      _
    $region3: #{tpu_custom_call.1} parent=1 // loop_header
      %s10 = sphi 0, %s14
      %p11 = scmp.ge.s32.totalorder %s10, 4
      %s20 = sphi 0, %s22
      %s23 = sphi 0, %s20
      %s24 = sphi 0, %s23
      %s40 = sphi 0, %s24
      %s44 = sphi 0, %s44
      %s46 = sphi 0, %s44
      %s47 = sphi 0, %s46
      %s61 = sphi 0, %s47
      %s65 = sphi 0, %s65
      %s67 = sphi 0, %s65
      %s68 = sphi 0, %s67
      %s82 = sphi 0, %s68
      %s86 = sphi 0, %s86
      %s88 = sphi 0, %s86
      %s89 = sphi 0, %s88
      %s103 = sphi 0, %s89
    $region4: #{tpu_custom_call.1} parent=1 // loop_header_branch
      %13 = sbr.rel (%p11) target = $region8
    $region5: #{tpu_custom_call.1} parent=1 // loop_body
      %s15 = ssub.s32 %s10, 1
      %s16 = ssub.s32 %s10, 2
      %s17 = sadd.s32 %s10, 1
      %s18 = ssub.s32 %s10, %s17
      %p19 = scmp.eq.s32.totalorder %s18, 0
      %s21 = sadd.s32 %s20, 1
      %s22 = scalar_select %p19, %s20, %s21
      %p25 = pneg %p19
      %p26 = scmp.eq.s32.totalorder %s10, 1
      %p27 = por %p25, %p26
      %p28 = scmp.ne.s32.totalorder %s20, %s23
      %p29 = scmp.eq.s32.totalorder %s10, 0
      %p30 = por %p28, %p29
      %p31 = scmp.ne.s32.totalorder %s20, %s23
      %p32 = scmp.eq.s32.totalorder %s15, 1
      %p33 = por %p31, %p32
      %p34 = scmp.ne.s32.totalorder %s23, %s24
      %p35 = scmp.eq.s32.totalorder %s15, 0
      %p36 = por %p34, %p35
      %p37 = scmp.ne.s32.totalorder %s23, %s24
      %p38 = scmp.eq.s32.totalorder %s16, 1
      %p39 = por %p37, %p38
      %p41 = scmp.ne.s32.totalorder %s24, %s40
      %p42 = scmp.eq.s32.totalorder %s16, 0
      %p43 = por %p41, %p42
      %s45 = sadd.s32 %s44, 1
      %p48 = scmp.eq.s32.totalorder %s10, 1
      %p49 = scmp.ne.s32.totalorder %s44, %s46
      %p50 = scmp.eq.s32.totalorder %s10, 0
      %p51 = por %p49, %p50
      %p52 = scmp.ne.s32.totalorder %s44, %s46
      %p53 = scmp.eq.s32.totalorder %s15, 1
      %p54 = por %p52, %p53
      %p55 = scmp.ne.s32.totalorder %s46, %s47
      %p56 = scmp.eq.s32.totalorder %s15, 0
      %p57 = por %p55, %p56
      %p58 = scmp.ne.s32.totalorder %s46, %s47
      %p59 = scmp.eq.s32.totalorder %s16, 1
      %p60 = por %p58, %p59
      %p62 = scmp.ne.s32.totalorder %s47, %s61
      %p63 = scmp.eq.s32.totalorder %s16, 0
      %p64 = por %p62, %p63
      %s66 = sadd.s32 %s65, 1
      %p69 = scmp.eq.s32.totalorder %s10, 1
      %p70 = scmp.ne.s32.totalorder %s65, %s67
      %p71 = scmp.eq.s32.totalorder %s10, 0
      %p72 = por %p70, %p71
      %p73 = scmp.ne.s32.totalorder %s65, %s67
      %p74 = scmp.eq.s32.totalorder %s15, 1
      %p75 = por %p73, %p74
      %p76 = scmp.ne.s32.totalorder %s67, %s68
      %p77 = scmp.eq.s32.totalorder %s15, 0
      %p78 = por %p76, %p77
      %p79 = scmp.ne.s32.totalorder %s67, %s68
      %p80 = scmp.eq.s32.totalorder %s16, 1
      %p81 = por %p79, %p80
      %p83 = scmp.ne.s32.totalorder %s68, %s82
      %p84 = scmp.eq.s32.totalorder %s16, 0
      %p85 = por %p83, %p84
      %s87 = sadd.s32 %s86, 1
      %p90 = scmp.eq.s32.totalorder %s10, 1
      %p91 = scmp.ne.s32.totalorder %s86, %s88
      %p92 = scmp.eq.s32.totalorder %s10, 0
      %p93 = por %p91, %p92
      %p94 = scmp.ne.s32.totalorder %s86, %s88
      %p95 = scmp.eq.s32.totalorder %s15, 1
      %p96 = por %p94, %p95
      %p97 = scmp.ne.s32.totalorder %s88, %s89
      %p98 = scmp.eq.s32.totalorder %s15, 0
      %p99 = por %p97, %p98
      %p100 = scmp.ne.s32.totalorder %s88, %s89
      %p101 = scmp.eq.s32.totalorder %s16, 1
      %p102 = por %p100, %p101
      %p104 = scmp.ne.s32.totalorder %s89, %s103
      %p105 = scmp.eq.s32.totalorder %s16, 0
      %p106 = por %p104, %p105
      %p107 = scmp.le.s32.totalorder 1, %s10
      %p108 = scmp.lt.s32.totalorder %s10, 3
      %p109 = pnand %p107, %p108
      %p110 = pneg %p109
      // Predicated region
      $region9: #{tpu_custom_call.1} parent=5 // pred_check
        _
      $region10: #{tpu_custom_call.1} parent=5 // pred_check_branch
        %112 = sbr.rel (%p109) target = $region12
      $region11: #{tpu_custom_call.1} parent=5 // pred_region
        %s113 = ssub.s32 %s10, 1
        // Predicated region
        $region13: #{tpu_custom_call.1} parent=11 // pred_check
          %p114 = pneg %p57
        $region14: #{tpu_custom_call.1} parent=11 // pred_check_branch
          %116 = sbr.rel (%p114) target = $region16
        $region15: #{tpu_custom_call.1} parent=11 // pred_region
          _
        $region16: #{tpu_custom_call.1} parent=11 // pred_fallthru
          _
        // Predicated region
        $region17: #{tpu_custom_call.1} parent=11 // pred_check
          %p117 = pneg %p78
        $region18: #{tpu_custom_call.1} parent=11 // pred_check_branch
          %119 = sbr.rel (%p117) target = $region20
        $region19: #{tpu_custom_call.1} parent=11 // pred_region
          _
        $region20: #{tpu_custom_call.1} parent=11 // pred_fallthru
          _
      $region12: #{tpu_custom_call.1} parent=5 // pred_fallthru
        _
      %p120 = scmp.lt.s32.totalorder %s10, 2
      // Predicated region
      $region21: #{tpu_custom_call.1} parent=5 // pred_check
        %p121 = pneg %p120
      $region22: #{tpu_custom_call.1} parent=5 // pred_check_branch
        %123 = sbr.rel (%p121) target = $region24
      $region23: #{tpu_custom_call.1} parent=5 // pred_region
        // Predicated region
        $region25: #{tpu_custom_call.1} parent=23 // pred_check
          %p124 = pneg %p30
        $region26: #{tpu_custom_call.1} parent=23 // pred_check_branch
          %126 = sbr.rel (%p124) target = $region28
        $region27: #{tpu_custom_call.1} parent=23 // pred_region
          %s127 = sand.u32 %s20, 1
          %s128 = sand.u32 %s20, 1
          %s129 = smul.addr %s128, 8
          %s130 = scalar_lea.vmem [#allocation2], %s129
          %s131 = smul.addr %s10, 4
          %s132 = scalar_lea.vmem %s0, %s131
          // Predicated region
          $region29: #{tpu_custom_call.1} parent=27 // pred_check
            _
          $region30: #{tpu_custom_call.1} parent=27 // pred_check_branch
            %134 = sbr.rel (0) target = $region32
          $region31: #{tpu_custom_call.1} parent=27 // pred_region
            // Predicated region
            $region33: #{tpu_custom_call.1} parent=31 // pred_check
              _
            $region34: #{tpu_custom_call.1} parent=31 // pred_check_branch
              %136 = sbr.rel target = $region36
            $region35: #{tpu_custom_call.1} parent=31 // pred_region
              // Predicated region
              $region48: #{tpu_custom_call.1} parent=35 // pred_check
                _
              $region49: #{tpu_custom_call.1} parent=35 // pred_check_branch
                %154 = sbr.rel (0) target = $region51
              $region50: #{tpu_custom_call.1} parent=35 // pred_region
                loop: start=0, step=1, limit=1
                $region52: #{tpu_custom_call.1} parent=50 // loop_pre_header
                  _
                $region53: #{tpu_custom_call.1} parent=50 // loop_header
                  %s156 = sphi 0, %s160
                  %p157 = scmp.ge.s32.totalorder %s156, 1
                  %s161 = sphi %s132, %s132
                  %s162 = sphi %s130, %s130
                $region54: #{tpu_custom_call.1} parent=50 // loop_header_branch
                  %159 = sbr.rel (%p157) target = $region58
                $region55: #{tpu_custom_call.1} parent=50 // loop_body
                  _
                $region56: #{tpu_custom_call.1} parent=50 // loop_footer
                  %s160 = sadd.s32 1, %s156
                $region57: #{tpu_custom_call.1} parent=50 // loop_footer_branch
                  %155 = sbr.rel target = $region53
                $region58: #{tpu_custom_call.1} parent=50 // loop_exit
                  _
                %s164 = ssub.s32 16, 1
                loop: start=0, step=1, limit=1
                $region59: #{tpu_custom_call.1} parent=50 // loop_pre_header
                  _
                $region60: #{tpu_custom_call.1} parent=50 // loop_header
                  %s166 = sphi 0, %s170
                  %p167 = scmp.ge.s32.totalorder %s166, 1
                  %s171 = sphi %s132, %s132
                  %s172 = sphi %s130, %s130
                $region61: #{tpu_custom_call.1} parent=50 // loop_header_branch
                  %169 = sbr.rel (%p167) target = $region65
                $region62: #{tpu_custom_call.1} parent=50 // loop_body
                  %v173 = vld [vmem:[%s171] sm:%s164]
                  %174 = vst [vmem:[%s172] sm:%s164] %v173
                  %v175 = vld [vmem:[%s171 + $0x8] sm:%s164]
                  %176 = vst [vmem:[%s172 + $0x4] sm:%s164] %v175
                $region63: #{tpu_custom_call.1} parent=50 // loop_footer
                  %s170 = sadd.s32 1, %s166
                $region64: #{tpu_custom_call.1} parent=50 // loop_footer_branch
                  %165 = sbr.rel target = $region60
                $region65: #{tpu_custom_call.1} parent=50 // loop_exit
                  _
              $region51: #{tpu_custom_call.1} parent=35 // pred_fallthru
                _
            $region36: #{tpu_custom_call.1} parent=31 // pred_fallthru
              _
            // Predicated region
            $region37: #{tpu_custom_call.1} parent=31 // pred_check
              _
            $region38: #{tpu_custom_call.1} parent=31 // pred_check_branch
              %138 = sbr.rel (0) target = $region40
            $region39: #{tpu_custom_call.1} parent=31 // pred_region
              %s140 = ssub.s32 16, 1
              loop: start=0, step=1, limit=1
              $region41: #{tpu_custom_call.1} parent=39 // loop_pre_header
                _
              $region42: #{tpu_custom_call.1} parent=39 // loop_header
                %s142 = sphi 0, %s146
                %p143 = scmp.ge.s32.totalorder %s142, 1
                %s147 = sphi %s132, %s132
                %s148 = sphi %s130, %s130
              $region43: #{tpu_custom_call.1} parent=39 // loop_header_branch
                %145 = sbr.rel (%p143) target = $region47
              $region44: #{tpu_custom_call.1} parent=39 // loop_body
                %v149 = vld [vmem:[%s147] sm:%s140]
                %150 = vst [vmem:[%s148] sm:%s140] %v149
                %v151 = vld [vmem:[%s147 + $0x8] sm:%s140]
                %152 = vst [vmem:[%s148 + $0x4] sm:%s140] %v151
              $region45: #{tpu_custom_call.1} parent=39 // loop_footer
                %s146 = sadd.s32 1, %s142
              $region46: #{tpu_custom_call.1} parent=39 // loop_footer_branch
                %141 = sbr.rel target = $region42
              $region47: #{tpu_custom_call.1} parent=39 // loop_exit
                _
            $region40: #{tpu_custom_call.1} parent=31 // pred_fallthru
              _
          $region32: #{tpu_custom_call.1} parent=27 // pred_fallthru
            _
          %177 = vnop
        $region28: #{tpu_custom_call.1} parent=23 // pred_fallthru
          _
      $region24: #{tpu_custom_call.1} parent=5 // pred_fallthru
        _
      %p178 = scmp.le.s32.totalorder 1, %s10
      %p179 = scmp.lt.s32.totalorder %s10, 3
      %p180 = pnand %p178, %p179
      %p181 = pneg %p180
      // Predicated region
      $region66: #{tpu_custom_call.1} parent=5 // pred_check
        _
      $region67: #{tpu_custom_call.1} parent=5 // pred_check_branch
        %183 = sbr.rel (%p180) target = $region69
      $region68: #{tpu_custom_call.1} parent=5 // pred_region
        %s184 = ssub.s32 %s10, 1
        %s185 = sand.u32 %s23, 1
        %s186 = sand.u32 %s23, 1
        %s187 = smul.addr %s186, 8
        %s188 = scalar_lea.vmem [#allocation2], %s187
        // Predicated region
        $region70: #{tpu_custom_call.1} parent=68 // pred_check
          %p189 = pneg %p36
        $region71: #{tpu_custom_call.1} parent=68 // pred_check_branch
          %191 = sbr.rel (%p189) target = $region73
        $region72: #{tpu_custom_call.1} parent=68 // pred_region
          _
        $region73: #{tpu_custom_call.1} parent=68 // pred_fallthru
          _
        %s192 = sand.u32 %s23, 1
        %s193 = sand.u32 %s23, 1
        %s194 = smul.addr %s193, 8
        %s195 = scalar_lea.vmem [#allocation2], %s194
        %p196 = pneg %p36
        %p197 = pneg %p33
        %p198 = pneg %p57
        %p199 = pneg %p54
        %p200 = pneg %p78
        %p201 = pneg %p75
        %p202 = pneg %p99
        %p203 = pneg %p96
        %p204 = scmp.eq.s32.totalorder %s15, 0
        // Predicated region
        $region74: #{tpu_custom_call.1} parent=68 // pred_check
          %p205 = pneg %p204
        $region75: #{tpu_custom_call.1} parent=68 // pred_check_branch
          %207 = sbr.rel (%p205) target = $region77
        $region76: #{tpu_custom_call.1} parent=68 // pred_region
          %vm208 = vcmask 64512
          %209 = vst.msk [vmem:[#allocation3] sm:$0xff] %vm208, 0.0
          %210 = vst.msk [vmem:[#allocation3 + $0x8] sm:$0xff] %vm208, 0.0
        $region77: #{tpu_custom_call.1} parent=68 // pred_fallthru
          _
        %v211 = vld [vmem:[%s1] sm:$0xff]
        %v212 = vld [vmem:[%s1 + $0x8] sm:$0xff]
        %v213 = vld [vmem:[%s2] sm:$0xff]
        %v214 = vld [vmem:[%s2 + $0x8] sm:$0xff]
        %v215 = vld [vmem:[%s188] sm:$0xf]
        %217 = vset.pattern.permute.xlu0 0
        %218 = vperm.xlu0 %217, %v213
        %v219 = vpop.permute.xlu0 %218
        %222 = vset.pattern.permute.xlu0 0
        %223 = vperm.xlu0 %222, %v214
        %v224 = vpop.permute.xlu0 %223
        %vm226 = vcmask 31744
        %v228 = vsel %vm226, %v211, 0
        %v231 = vsel %vm226, %v212, 0
        %vm233 = vcmask 1043456
        %v235 = vsel %vm233, %v215, 0
        %237 = vmatprep.subr.mxu0 0.0
        %238 = vmatpush1.msra.mxu0 0.0
        %239 = vmatprep.subr.mxu0 0.0
        %240 = vmatpush1.msra.mxu0 0.0
        %241 = vmatprep.subr.mxu0 0.0
        %242 = vmatpush1.msra.mxu0 0.0
        %243 = vmatprep.subr.mxu0 0.0
        %244 = vmatpush1.msra.mxu0 0.0
        %245 = vmatprep.subr.mxu0 0.0
        %246 = vmatpush1.msra.mxu0 0.0
        %247 = vmatprep.subr.mxu0 0.0
        %248 = vmatpush1.msra.mxu0 0.0
        %249 = vmatprep.subr.mxu0 0.0
        %250 = vmatpush1.msra.mxu0 0.0
        %251 = vmatprep.subr.mxu0 0.0
        %252 = vmatpush1.msra.mxu0 0.0
        %253 = vmatprep.subr.mxu0 0.0
        %254 = vmatpush1.msra.mxu0 0.0
        %255 = vmatprep.subr.mxu0 0.0
        %256 = vmatpush1.msra.mxu0 0.0
        %257 = vmatprep.subr.mxu0 0.0
        %258 = vmatpush1.msra.mxu0 0.0
        %259 = vmatprep.subr.mxu0 0.0
        %260 = vmatpush1.msra.mxu0 0.0
        %261 = vmatprep.subr.mxu0 0.0
        %262 = vmatpush1.msra.mxu0 0.0
        %263 = vmatprep.subr.mxu0 0.0
        %264 = vmatpush1.msra.mxu0 0.0
        %265 = vmatprep.subr.mxu0 0.0
        %266 = vmatpush1.msra.mxu0 0.0
        %267 = vmatprep.subr.mxu0 0.0
        %268 = vmatpush1.msra.mxu0 %v235
        %269 = vmatprep.subr.mxu0 0.0
        %270 = vmatpush2.msra.mxu0 0.0
        %271 = vmatprep.subr.mxu0 0.0
        %272 = vmatpush2.msra.mxu0 0.0
        %273 = vmatprep.subr.mxu0 0.0
        %274 = vmatpush2.msra.mxu0 0.0
        %275 = vmatprep.subr.mxu0 0.0
        %276 = vmatpush2.msra.mxu0 0.0
        %277 = vmatprep.subr.mxu0 0.0
        %278 = vmatpush2.msra.mxu0 0.0
        %279 = vmatprep.subr.mxu0 0.0
        %280 = vmatpush2.msra.mxu0 0.0
        %281 = vmatprep.subr.mxu0 0.0
        %282 = vmatpush2.msra.mxu0 0.0
        %283 = vmatprep.subr.mxu0 0.0
        %284 = vmatpush2.msra.mxu0 0.0
        %285 = vmatprep.subr.mxu0 0.0
        %286 = vmatpush2.msra.mxu0 0.0
        %287 = vmatprep.subr.mxu0 0.0
        %288 = vmatpush2.msra.mxu0 0.0
        %289 = vmatprep.subr.mxu0 0.0
        %290 = vmatpush2.msra.mxu0 0.0
        %291 = vmatprep.subr.mxu0 0.0
        %292 = vmatpush2.msra.mxu0 0.0
        %293 = vmatprep.subr.mxu0 0.0
        %294 = vmatpush2.msra.mxu0 0.0
        %295 = vmatprep.subr.mxu0 0.0
        %296 = vmatpush2.msra.mxu0 0.0
        %297 = vmatprep.subr.mxu0 0.0
        %298 = vmatpush2.msra.mxu0 0.0
        %299 = vmatprep.subr.mxu0 0.0
        %300 = vmatpush2.msra.mxu0 0.0
        %301 = vmatprep.mubr.f32.mxu0 0.0
        %302 = vmatmul.mubr.f32.gmra.mxu0 %v228
        %v303 = vpop.f32.mrf.mxu0
        %v304 = vadd.f32 %v219, %v303
        %v305 = vpop.f32.mrf.mxu0
        %306 = vmatprep.mubr.f32.mxu0 0.0
        %307 = vmatmul.mubr.f32.gmra.mxu0 %v231
        %v308 = vpop.f32.mrf.mxu0
        %v309 = vadd.f32 %v224, %v308
        %v310 = vpop.f32.mrf.mxu0
        %311 = vdwg.mxu0
        %s312 = scalar_lea.vmem %s188, 4 [#allocation2]
        %v313 = vld [vmem:[%s312] sm:$0xf]
        %v315 = vsel %vm233, %v313, 0
        %317 = vmatprep.subr.mxu0 0.0
        %318 = vmatpush1.msra.mxu0 0.0
        %319 = vmatprep.subr.mxu0 0.0
        %320 = vmatpush1.msra.mxu0 0.0
        %321 = vmatprep.subr.mxu0 0.0
        %322 = vmatpush1.msra.mxu0 0.0
        %323 = vmatprep.subr.mxu0 0.0
        %324 = vmatpush1.msra.mxu0 0.0
        %325 = vmatprep.subr.mxu0 0.0
        %326 = vmatpush1.msra.mxu0 0.0
        %327 = vmatprep.subr.mxu0 0.0
        %328 = vmatpush1.msra.mxu0 0.0
        %329 = vmatprep.subr.mxu0 0.0
        %330 = vmatpush1.msra.mxu0 0.0
        %331 = vmatprep.subr.mxu0 0.0
        %332 = vmatpush1.msra.mxu0 0.0
        %333 = vmatprep.subr.mxu0 0.0
        %334 = vmatpush1.msra.mxu0 0.0
        %335 = vmatprep.subr.mxu0 0.0
        %336 = vmatpush1.msra.mxu0 0.0
        %337 = vmatprep.subr.mxu0 0.0
        %338 = vmatpush1.msra.mxu0 0.0
        %339 = vmatprep.subr.mxu0 0.0
        %340 = vmatpush1.msra.mxu0 0.0
        %341 = vmatprep.subr.mxu0 0.0
        %342 = vmatpush1.msra.mxu0 0.0
        %343 = vmatprep.subr.mxu0 0.0
        %344 = vmatpush1.msra.mxu0 0.0
        %345 = vmatprep.subr.mxu0 0.0
        %346 = vmatpush1.msra.mxu0 0.0
        %347 = vmatprep.subr.mxu0 0.0
        %348 = vmatpush1.msra.mxu0 %v315
        %349 = vmatprep.subr.mxu0 0.0
        %350 = vmatpush2.msra.mxu0 0.0
        %351 = vmatprep.subr.mxu0 0.0
        %352 = vmatpush2.msra.mxu0 0.0
        %353 = vmatprep.subr.mxu0 0.0
        %354 = vmatpush2.msra.mxu0 0.0
        %355 = vmatprep.subr.mxu0 0.0
        %356 = vmatpush2.msra.mxu0 0.0
        %357 = vmatprep.subr.mxu0 0.0
        %358 = vmatpush2.msra.mxu0 0.0
        %359 = vmatprep.subr.mxu0 0.0
        %360 = vmatpush2.msra.mxu0 0.0
        %361 = vmatprep.subr.mxu0 0.0
        %362 = vmatpush2.msra.mxu0 0.0
        %363 = vmatprep.subr.mxu0 0.0
        %364 = vmatpush2.msra.mxu0 0.0
        %365 = vmatprep.subr.mxu0 0.0
        %366 = vmatpush2.msra.mxu0 0.0
        %367 = vmatprep.subr.mxu0 0.0
        %368 = vmatpush2.msra.mxu0 0.0
        %369 = vmatprep.subr.mxu0 0.0
        %370 = vmatpush2.msra.mxu0 0.0
        %371 = vmatprep.subr.mxu0 0.0
        %372 = vmatpush2.msra.mxu0 0.0
        %373 = vmatprep.subr.mxu0 0.0
        %374 = vmatpush2.msra.mxu0 0.0
        %375 = vmatprep.subr.mxu0 0.0
        %376 = vmatpush2.msra.mxu0 0.0
        %377 = vmatprep.subr.mxu0 0.0
        %378 = vmatpush2.msra.mxu0 0.0
        %379 = vmatprep.subr.mxu0 0.0
        %380 = vmatpush2.msra.mxu0 0.0
        %381 = vmatprep.mubr.f32.mxu0 0.0
        %382 = vmatmul.mubr.f32.gmra.mxu0 %v228
        %v383 = vpop.f32.mrf.mxu0
        %v384 = vadd.f32 %v219, %v383
        %v385 = vpop.f32.mrf.mxu0
        %386 = vmatprep.mubr.f32.mxu0 0.0
        %387 = vmatmul.mubr.f32.gmra.mxu0 %v231
        %v388 = vpop.f32.mrf.mxu0
        %v389 = vadd.f32 %v224, %v388
        %v390 = vpop.f32.mrf.mxu0
        %391 = vdwg.mxu0
        %v392 = vmax.f32 %v309, %v389
        %v393 = vsub.f32 %v309, %v392
        %v394 = vmul.f32 %v393, 1.442695
        %v395 = vpow.pop %v394
        %v396 = vsub.f32 %v389, %v392
        %v397 = vmul.f32 %v396, 1.442695
        %v398 = vpow.pop %v397
        %v399 = vadd.f32 %v395, %v398
        %v400 = vrcp.pop %v399
        %v401 = vmul.f32 %v395, %v400
        %v402 = vld [vmem:[#allocation3] sm:$0xff]
        %403 = vmatprep.subr.mxu0 0.0
        %404 = vmatpush1.xpose.msra.mxu0 0.0
        %405 = vmatprep.subr.mxu0 0.0
        %406 = vmatpush1.xpose.msra.mxu0 0.0
        %407 = vmatprep.subr.mxu0 0.0
        %408 = vmatpush1.xpose.msra.mxu0 0.0
        %409 = vmatprep.subr.mxu0 0.0
        %410 = vmatpush1.xpose.msra.mxu0 0.0
        %411 = vmatprep.subr.mxu0 0.0
        %412 = vmatpush1.xpose.msra.mxu0 0.0
        %413 = vmatprep.subr.mxu0 0.0
        %414 = vmatpush1.xpose.msra.mxu0 0.0
        %415 = vmatprep.subr.mxu0 0.0
        %416 = vmatpush1.xpose.msra.mxu0 0.0
        %417 = vmatprep.subr.mxu0 0.0
        %418 = vmatpush1.xpose.msra.mxu0 0.0
        %419 = vmatprep.subr.mxu0 0.0
        %420 = vmatpush1.xpose.msra.mxu0 0.0
        %421 = vmatprep.subr.mxu0 0.0
        %422 = vmatpush1.xpose.msra.mxu0 0.0
        %423 = vmatprep.subr.mxu0 0.0
        %424 = vmatpush1.xpose.msra.mxu0 0.0
        %425 = vmatprep.subr.mxu0 0.0
        %426 = vmatpush1.xpose.msra.mxu0 0.0
        %427 = vmatprep.subr.mxu0 0.0
        %428 = vmatpush1.xpose.msra.mxu0 0.0
        %429 = vmatprep.subr.mxu0 0.0
        %430 = vmatpush1.xpose.msra.mxu0 0.0
        %431 = vmatprep.subr.mxu0 0.0
        %432 = vmatpush1.xpose.msra.mxu0 0.0
        %433 = vmatprep.subr.mxu0 0.0
        %434 = vmatpush1.xpose.msra.mxu0 %v401
        %435 = vmatprep.subr.mxu0 0.0
        %436 = vmatpush2.xpose.msra.mxu0 0.0
        %437 = vmatprep.subr.mxu0 0.0
        %438 = vmatpush2.xpose.msra.mxu0 0.0
        %439 = vmatprep.subr.mxu0 0.0
        %440 = vmatpush2.xpose.msra.mxu0 0.0
        %441 = vmatprep.subr.mxu0 0.0
        %442 = vmatpush2.xpose.msra.mxu0 0.0
        %443 = vmatprep.subr.mxu0 0.0
        %444 = vmatpush2.xpose.msra.mxu0 0.0
        %445 = vmatprep.subr.mxu0 0.0
        %446 = vmatpush2.xpose.msra.mxu0 0.0
        %447 = vmatprep.subr.mxu0 0.0
        %448 = vmatpush2.xpose.msra.mxu0 0.0
        %449 = vmatprep.subr.mxu0 0.0
        %450 = vmatpush2.xpose.msra.mxu0 0.0
        %451 = vmatprep.subr.mxu0 0.0
        %452 = vmatpush2.xpose.msra.mxu0 0.0
        %453 = vmatprep.subr.mxu0 0.0
        %454 = vmatpush2.xpose.msra.mxu0 0.0
        %455 = vmatprep.subr.mxu0 0.0
        %456 = vmatpush2.xpose.msra.mxu0 0.0
        %457 = vmatprep.subr.mxu0 0.0
        %458 = vmatpush2.xpose.msra.mxu0 0.0
        %459 = vmatprep.subr.mxu0 0.0
        %460 = vmatpush2.xpose.msra.mxu0 0.0
        %461 = vmatprep.subr.mxu0 0.0
        %462 = vmatpush2.xpose.msra.mxu0 0.0
        %463 = vmatprep.subr.mxu0 0.0
        %464 = vmatpush2.xpose.msra.mxu0 0.0
        %465 = vmatprep.subr.mxu0 0.0
        %466 = vmatpush2.xpose.msra.mxu0 0.0
        %467 = vmatprep.mubr.f32.mxu0 0.0
        %468 = vmatmul.mubr.f32.gmra.mxu0 %v304
        %v469 = vpop.f32.mrf.mxu0
        %v470 = vadd.f32 0.0, %v469
        %v471 = vpop.f32.mrf.mxu0
        %472 = vdwg.mxu0
        %v473 = vadd.f32 %v402, %v470
        %vm474 = vcmask 64512
        %475 = vst.msk [vmem:[#allocation3] sm:$0xff] %vm474, %v473
        %v476 = vmul.f32 %v398, %v400
        %s477 = scalar_lea.vmem [#allocation3], 8
        %v478 = vld [vmem:[%s477] sm:$0xff]
        %479 = vmatprep.subr.mxu0 0.0
        %480 = vmatpush1.xpose.msra.mxu0 0.0
        %481 = vmatprep.subr.mxu0 0.0
        %482 = vmatpush1.xpose.msra.mxu0 0.0
        %483 = vmatprep.subr.mxu0 0.0
        %484 = vmatpush1.xpose.msra.mxu0 0.0
        %485 = vmatprep.subr.mxu0 0.0
        %486 = vmatpush1.xpose.msra.mxu0 0.0
        %487 = vmatprep.subr.mxu0 0.0
        %488 = vmatpush1.xpose.msra.mxu0 0.0
        %489 = vmatprep.subr.mxu0 0.0
        %490 = vmatpush1.xpose.msra.mxu0 0.0
        %491 = vmatprep.subr.mxu0 0.0
        %492 = vmatpush1.xpose.msra.mxu0 0.0
        %493 = vmatprep.subr.mxu0 0.0
        %494 = vmatpush1.xpose.msra.mxu0 0.0
        %495 = vmatprep.subr.mxu0 0.0
        %496 = vmatpush1.xpose.msra.mxu0 0.0
        %497 = vmatprep.subr.mxu0 0.0
        %498 = vmatpush1.xpose.msra.mxu0 0.0
        %499 = vmatprep.subr.mxu0 0.0
        %500 = vmatpush1.xpose.msra.mxu0 0.0
        %501 = vmatprep.subr.mxu0 0.0
        %502 = vmatpush1.xpose.msra.mxu0 0.0
        %503 = vmatprep.subr.mxu0 0.0
        %504 = vmatpush1.xpose.msra.mxu0 0.0
        %505 = vmatprep.subr.mxu0 0.0
        %506 = vmatpush1.xpose.msra.mxu0 0.0
        %507 = vmatprep.subr.mxu0 0.0
        %508 = vmatpush1.xpose.msra.mxu0 0.0
        %509 = vmatprep.subr.mxu0 0.0
        %510 = vmatpush1.xpose.msra.mxu0 %v476
        %511 = vmatprep.subr.mxu0 0.0
        %512 = vmatpush2.xpose.msra.mxu0 0.0
        %513 = vmatprep.subr.mxu0 0.0
        %514 = vmatpush2.xpose.msra.mxu0 0.0
        %515 = vmatprep.subr.mxu0 0.0
        %516 = vmatpush2.xpose.msra.mxu0 0.0
        %517 = vmatprep.subr.mxu0 0.0
        %518 = vmatpush2.xpose.msra.mxu0 0.0
        %519 = vmatprep.subr.mxu0 0.0
        %520 = vmatpush2.xpose.msra.mxu0 0.0
        %521 = vmatprep.subr.mxu0 0.0
        %522 = vmatpush2.xpose.msra.mxu0 0.0
        %523 = vmatprep.subr.mxu0 0.0
        %524 = vmatpush2.xpose.msra.mxu0 0.0
        %525 = vmatprep.subr.mxu0 0.0
        %526 = vmatpush2.xpose.msra.mxu0 0.0
        %527 = vmatprep.subr.mxu0 0.0
        %528 = vmatpush2.xpose.msra.mxu0 0.0
        %529 = vmatprep.subr.mxu0 0.0
        %530 = vmatpush2.xpose.msra.mxu0 0.0
        %531 = vmatprep.subr.mxu0 0.0
        %532 = vmatpush2.xpose.msra.mxu0 0.0
        %533 = vmatprep.subr.mxu0 0.0
        %534 = vmatpush2.xpose.msra.mxu0 0.0
        %535 = vmatprep.subr.mxu0 0.0
        %536 = vmatpush2.xpose.msra.mxu0 0.0
        %537 = vmatprep.subr.mxu0 0.0
        %538 = vmatpush2.xpose.msra.mxu0 0.0
        %539 = vmatprep.subr.mxu0 0.0
        %540 = vmatpush2.xpose.msra.mxu0 0.0
        %541 = vmatprep.subr.mxu0 0.0
        %542 = vmatpush2.xpose.msra.mxu0 0.0
        %543 = vmatprep.mubr.f32.mxu0 0.0
        %544 = vmatmul.mubr.f32.gmra.mxu0 %v384
        %v545 = vpop.f32.mrf.mxu0
        %v546 = vadd.f32 0.0, %v545
        %v547 = vpop.f32.mrf.mxu0
        %548 = vdwg.mxu0
        %v549 = vadd.f32 %v478, %v546
        %550 = vst.msk [vmem:[%s477] sm:$0xff] %vm474, %v549
        // Predicated region
        $region78: #{tpu_custom_call.1} parent=68 // pred_check
          %p551 = pneg %p96
        $region79: #{tpu_custom_call.1} parent=68 // pred_check_branch
          %553 = sbr.rel (%p551) target = $region81
        $region80: #{tpu_custom_call.1} parent=68 // pred_region
          %s555 = ssub.s32 256, 256
          %556 = vsyncadd [#allocation4], %s555
          %s557 = sshll.u32 [#allocation3], 4
          %s558 = int_to_ptr.vmem [resolvable:$true] %s557
          %563 = dma.vmem_to_hbm [thread:$0]  %s558, 256, %s3, [#allocation4], 128, 128, 8
        $region81: #{tpu_custom_call.1} parent=68 // pred_fallthru
          _
        // Predicated region
        $region82: #{tpu_custom_call.1} parent=68 // pred_check
          %p564 = pneg %p96
        $region83: #{tpu_custom_call.1} parent=68 // pred_check_branch
          %566 = sbr.rel (%p564) target = $region85
        $region84: #{tpu_custom_call.1} parent=68 // pred_region
          %567 = dma.done [#allocation4], 256
        $region85: #{tpu_custom_call.1} parent=68 // pred_fallthru
          _
      $region69: #{tpu_custom_call.1} parent=5 // pred_fallthru
        _
      %p568 = scmp.le.s32.totalorder 2, %s10
      // Predicated region
      $region86: #{tpu_custom_call.1} parent=5 // pred_check
        %p569 = pneg %p568
      $region87: #{tpu_custom_call.1} parent=5 // pred_check_branch
        %571 = sbr.rel (%p569) target = $region89
      $region88: #{tpu_custom_call.1} parent=5 // pred_region
        %s572 = ssub.s32 %s10, 2
      $region89: #{tpu_custom_call.1} parent=5 // pred_fallthru
        _
    $region6: #{tpu_custom_call.1} parent=1 // loop_footer
      %s14 = sadd.s32 1, %s10
    $region7: #{tpu_custom_call.1} parent=1 // loop_footer_branch
      %9 = sbr.rel target = $region3
    $region8: #{tpu_custom_call.1} parent=1 // loop_exit
      _
    %573 = vsyncpa [#allocation4], 1
    %s574 = scalar_lea.sflag [#allocation4], 1
    %575 = vsyncpa %s574, 1

</llo_original>
